<compile_context>
chip_gen: v7x
topology: tpu7x:2x2x1
jax: 0.10.0
libtpu: 0.0.40
codegen_flags: <defaults>
</compile_context>

<pallas_src>
import jax
import jax.numpy as jnp
from jax import lax
from jax.experimental import pallas as pl
from jax.experimental.pallas import tpu as pltpu

N_FTRS = 128
NUM_CLASSES = {"cat": 10, "slv": 4, "neck": 5, "ubl": 3, "lbl": 3, "clos": 6}
HEAD_ORDER = ["cat", "slv", "neck", "ubl", "lbl", "clos"]

# Static lane segments of the fused (packed) head output.
_SEG_BOUNDS = []
_off = 0
for _name in HEAD_ORDER:
    _n = NUM_CLASSES[_name]
    _SEG_BOUNDS.append((_off, _off + _n))
    _off += _n
TOTAL_CLASSES = _off          # 31 real logit lanes
HEAD_PAD = 128                # lane-dense packed output width


def fashion_kernel(x_ref, wbb_ref, bbb_ref, wh_ref, bh_ref, o_ref, acc_ref):
    k = pl.program_id(1)

    @pl.when(k == 0)
    def _init():
        acc_ref[...] = jnp.zeros_like(acc_ref)

    # Backbone GEMM partial product: f32 read from HBM, bf16 cast in VMEM,
    # f32 accumulation on the MXU.
    acc_ref[...] += jnp.dot(x_ref[...].astype(jnp.bfloat16),
                            wbb_ref[...].astype(jnp.bfloat16),
                            preferred_element_type=jnp.float32)

    @pl.when(k == pl.num_programs(1) - 1)
    def _epilogue():
        # Backbone bias + ReLU -> features [tm, 128] (f32).
        feats = jnp.maximum(acc_ref[...] + bbb_ref[...], 0.0)

        # Single fused head GEMM (bf16 operands, zero-padded lanes), f32 acc.
        logits = jnp.dot(feats.astype(jnp.bfloat16), wh_ref[...],
                         preferred_element_type=jnp.float32) + bh_ref[...]

        lane = lax.broadcasted_iota(jnp.int32, (1, HEAD_PAD), 1)
        valid = lane < TOTAL_CLASSES
        neg = jnp.float32(-1e30)

        # ONE masked global max (softmax is shift-invariant per segment; all
        # exp arguments stay <= 0).
        m = jnp.max(jnp.where(valid, logits, neg), axis=-1, keepdims=True)
        e = jnp.exp(logits - m)

        # Per-head denominator scattered back onto its lane segment; padded
        # lanes keep denominator 1.0.
        d_full = jnp.ones_like(logits)
        for lo, hi in _SEG_BOUNDS:
            seg = (lane >= lo) & (lane < hi)
            d_seg = jnp.sum(jnp.where(seg, e, 0.0), axis=-1, keepdims=True)
            d_full = jnp.where(seg, d_seg, d_full)

        # Exact normalization (approx=False) so each softmax row sums to 1.
        probs = e * pl.reciprocal(d_full, approx=False)
        probs = jnp.where(valid, probs, 0.0)          # zero the padded lanes
        o_ref[...] = probs.astype(o_ref.dtype)


def _pick_tile(dim, target, align):
    """Largest multiple of `align` dividing `dim` and <= target, else `dim`."""
    t = min(target, dim)
    t = (t // align) * align
    while t >= align:
        if dim % t == 0:
            return t
        t -= align
    return dim


def fashion_model(image, params):
    """image: [B, C, H, W] float32. Returns list of 6 softmax outputs."""
    B = image.shape[0]
    x_flat = image.reshape(B, -1)          # NCHW -> [B, C*H*W] (torch .view)
    K = x_flat.shape[1]

    # Keep x / w_bb in f32 (single HBM read; bf16 cast happens in-kernel).
    w_bb = params["w_bb"].astype(jnp.float32)
    b_bb = params["b_bb"].astype(jnp.float32)

    # Pad K to a multiple of 128 with zeros (zero rows contribute nothing).
    K_pad = ((K + 127) // 128) * 128
    if K_pad != K:
        x_flat = jnp.pad(x_flat, ((0, 0), (0, K_pad - K)))
        w_bb = jnp.pad(w_bb, ((0, K_pad - K), (0, 0)))

    # Fuse the six head Linears into one lane-dense [128, 128] bf16 weight.
    w_heads = jnp.zeros((N_FTRS, HEAD_PAD), jnp.float32)
    b_heads = jnp.zeros((1, HEAD_PAD), jnp.float32)
    for name, (lo, hi) in zip(HEAD_ORDER, _SEG_BOUNDS):
        w_heads = w_heads.at[:, lo:hi].set(params[f"w_{name}"].astype(jnp.float32))
        b_heads = b_heads.at[:, lo:hi].set(params[f"b_{name}"].astype(jnp.float32))
    w_heads = w_heads.astype(jnp.bfloat16)

    # Tile sizes:
    #  * tm target 256 (matches v6e/v7x 256x256 MXU), but capped at B/2 when
    #    B >= 16 so the "parallel" batch axis has >= 2 tiles (v7x dual-TC).
    #  * tk target 2048: ~3 MiB of double-buffered f32 blocks per step, far
    #    under the default scoped VMEM, and per-step DMA >> pipeline overhead.
    if B % 8 == 0:
        tm_target = min(256, B // 2) if B >= 16 else B
        tm = _pick_tile(B, tm_target, 8)
    else:
        tm = B
    tk = _pick_tile(K_pad, 2048, 128)
    grid = (B // tm, K_pad // tk)

    packed = pl.pallas_call(
        fashion_kernel,
        out_shape=jax.ShapeDtypeStruct((B, HEAD_PAD), jnp.float32),
        grid_spec=pltpu.PrefetchScalarGridSpec(
            num_scalar_prefetch=0,
            grid=grid,
            in_specs=[
                pl.BlockSpec((tm, tk), lambda i, k: (i, k)),        # x tile (f32)
                pl.BlockSpec((tk, N_FTRS), lambda i, k: (k, 0)),    # w_bb tile (f32)
                pl.BlockSpec((1, N_FTRS), lambda i, k: (0, 0)),     # b_bb (resident)
                pl.BlockSpec((N_FTRS, HEAD_PAD), lambda i, k: (0, 0)),  # fused head W (bf16)
                pl.BlockSpec((1, HEAD_PAD), lambda i, k: (0, 0)),       # fused head b (f32)
            ],
            out_specs=pl.BlockSpec((tm, HEAD_PAD), lambda i, k: (i, 0)),
            scratch_shapes=[pltpu.VMEM((tm, N_FTRS), jnp.float32)],  # feats accum
        ),
        compiler_params=pltpu.CompilerParams(
            dimension_semantics=("parallel", "arbitrary"),
        ),
    )(x_flat, w_bb, b_bb, w_heads, b_heads)

    # Slice the packed lane-dense output into the 6 per-head softmax outputs.
    return [packed[:, lo:hi] for lo, hi in _SEG_BOUNDS]


def init_params(key, in_dim):
    keys = jax.random.split(key, 2 + 2 * len(HEAD_ORDER))
    params = {
        "w_bb": 0.05 * jax.random.normal(keys[0], (in_dim, N_FTRS), jnp.float32),
        "b_bb": 0.01 * jax.random.normal(keys[1], (1, N_FTRS), jnp.float32),
    }
    for i, name in enumerate(HEAD_ORDER):
        n = NUM_CLASSES[name]
        params[f"w_{name}"] = 0.05 * jax.random.normal(
            keys[2 + 2 * i], (N_FTRS, n), jnp.float32)
        params[f"b_{name}"] = 0.01 * jax.random.normal(
            keys[3 + 2 * i], (1, n), jnp.float32)
    return params


def reference_model(image, params):
    """Plain-JAX reference (same bf16 operands / f32 accumulation as kernel)."""
    B = image.shape[0]
    x = image.reshape(B, -1)
    feats = jnp.dot(x.astype(jnp.bfloat16), params["w_bb"].astype(jnp.bfloat16),
                    preferred_element_type=jnp.float32) + params["b_bb"]
    feats = jnp.maximum(feats, 0.0)
    outs = []
    for name in HEAD_ORDER:
        logits = jnp.dot(feats.astype(jnp.bfloat16),
                         params[f"w_{name}"].astype(jnp.bfloat16),
                         preferred_element_type=jnp.float32) + params[f"b_{name}"]
        outs.append(jax.nn.softmax(logits, axis=1))
    return outs


if __name__ == "__main__":
    key = jax.random.PRNGKey(0)
    k_img, k_par = jax.random.split(key)

    B, C, H, W = 2, 4, 16, 16
    image = jax.random.normal(k_img, (B, C, H, W), jnp.float32)
    params = init_params(k_par, C * H * W)

    outs = fashion_model(image, params)
    outs = jax.block_until_ready(outs)

    refs = reference_model(image, params)
    for o, r in zip(outs, refs):
        assert o.shape == r.shape
        # bf16 MXU operands in both kernel and reference -> compare at 2e-3.
        assert jnp.allclose(o, r, atol=2e-3, rtol=2e-3)
        # exact reciprocal -> each softmax row sums to ~1 to f32 precision.
        assert jnp.allclose(jnp.sum(o, axis=1), 1.0, atol=2e-3)

    print("KERNEL_OK")
</pallas_src>

<mosaic_0001>
module attributes {stable_mosaic.version = 11 : i64} {
  func.func @fashion_kernel(%arg0: i32, %arg1: i32, %arg2: memref<2x1024xf32, #tpu.memory_space<vmem>>, %arg3: memref<1024x128xf32, #tpu.memory_space<vmem>>, %arg4: memref<1x128xf32, #tpu.memory_space<vmem>>, %arg5: memref<128x128xbf16, #tpu.memory_space<vmem>>, %arg6: memref<1x128xf32, #tpu.memory_space<vmem>>, %arg7: memref<2x128xf32, #tpu.memory_space<vmem>>, %arg8: memref<2x128xf32, #tpu.memory_space<vmem>>) attributes {dimension_semantics = [#tpu.dimension_semantics<parallel>, #tpu.dimension_semantics<arbitrary>], iteration_bounds = array<i64: 1, 1>, scalar_prefetch = 0 : i64, scratch_operands = 1 : i64, tpu.core_type = #tpu.core_type<tc>, window_params = [{transform_indices = @transform_0, window_bounds = array<i64: 2, 1024>}, {transform_indices = @transform_1, window_bounds = array<i64: 1024, 128>}, {pipeline_mode = #tpu.pipeline_mode<synchronous>, transform_indices = @transform_2, window_bounds = array<i64: 1, 128>}, {pipeline_mode = #tpu.pipeline_mode<synchronous>, transform_indices = @transform_3, window_bounds = array<i64: 128, 128>}, {pipeline_mode = #tpu.pipeline_mode<synchronous>, transform_indices = @transform_4, window_bounds = array<i64: 1, 128>}, {transform_indices = @transform_5, window_bounds = array<i64: 2, 128>}]} {
    %c0_i32 = arith.constant 0 : i32
    %0 = arith.cmpi eq, %arg1, %c0_i32 : i32
    %1 = arith.extui %0 : i1 to i32
    %c0_i32_0 = arith.constant 0 : i32
    %2 = arith.cmpi ne, %1, %c0_i32_0 : i32
    scf.if %2 {
      %cst_10 = arith.constant 0.000000e+00 : f32
      %14 = vector.broadcast %cst_10 : f32 to vector<2x128xf32>
      %c0_11 = arith.constant 0 : index
      %c0_12 = arith.constant 0 : index
      %15 = vector.load %arg8[%c0_11, %c0_12] : memref<2x128xf32, #tpu.memory_space<vmem>>, vector<2x128xf32>
      tpu.vector_store %arg8[%c0_11, %c0_12], %14 {strides = array<i32>} : memref<2x128xf32, #tpu.memory_space<vmem>>, vector<2x128xf32>,
    } else {
    }
    %c0 = arith.constant 0 : index
    %c0_1 = arith.constant 0 : index
    %3 = vector.load %arg8[%c0, %c0_1] : memref<2x128xf32, #tpu.memory_space<vmem>>, vector<2x128xf32>
    %c0_2 = arith.constant 0 : index
    %c0_3 = arith.constant 0 : index
    %4 = vector.load %arg2[%c0_2, %c0_3] : memref<2x1024xf32, #tpu.memory_space<vmem>>, vector<2x1024xf32>
    %5 = arith.truncf %4 : vector<2x1024xf32> to vector<2x1024xbf16>
    %c0_4 = arith.constant 0 : index
    %c0_5 = arith.constant 0 : index
    %6 = vector.load %arg3[%c0_4, %c0_5] : memref<1024x128xf32, #tpu.memory_space<vmem>>, vector<1024x128xf32>
    %7 = arith.truncf %6 : vector<1024x128xf32> to vector<1024x128xbf16>
    %cst = arith.constant dense<0.000000e+00> : vector<2x128xf32>
    %8 = tpu.matmul %5, %7, %cst {dimension_numbers = #tpu.dot_dimension_numbers<[1], [0], [0], [1], [0, 0, 1, 1], [], []>} : vector<2x1024xbf16>, vector<1024x128xbf16>, vector<2x128xf32> -> vector<2x128xf32>
    %9 = arith.addf %3, %8 : vector<2x128xf32>
    %c0_6 = arith.constant 0 : index
    %c0_7 = arith.constant 0 : index
    %10 = vector.load %arg8[%c0_6, %c0_7] : memref<2x128xf32, #tpu.memory_space<vmem>>, vector<2x128xf32>
    tpu.vector_store %arg8[%c0_6, %c0_7], %9 {strides = array<i32>} : memref<2x128xf32, #tpu.memory_space<vmem>>, vector<2x128xf32>,
    %c0_i32_8 = arith.constant 0 : i32
    %11 = arith.cmpi eq, %arg1, %c0_i32_8 : i32
    %12 = arith.extui %11 : i1 to i32
    %c0_i32_9 = arith.constant 0 : i32
    %13 = arith.cmpi ne, %12, %c0_i32_9 : i32
    scf.if %13 {
      %c0_10 = arith.constant 0 : index
      %c0_11 = arith.constant 0 : index
      %14 = vector.load %arg8[%c0_10, %c0_11] : memref<2x128xf32, #tpu.memory_space<vmem>>, vector<2x128xf32>
      %c0_12 = arith.constant 0 : index
      %c0_13 = arith.constant 0 : index
      %15 = vector.load %arg4[%c0_12, %c0_13] : memref<1x128xf32, #tpu.memory_space<vmem>>, vector<1x128xf32>
      %16 = vector.broadcast %15 : vector<1x128xf32> to vector<2x128xf32>
      %17 = arith.addf %14, %16 : vector<2x128xf32>
      %cst_14 = arith.constant 0.000000e+00 : f32
      %18 = vector.broadcast %cst_14 : f32 to vector<2x128xf32>
      %19 = arith.maximumf %17, %18 : vector<2x128xf32>
      %20 = arith.truncf %19 : vector<2x128xf32> to vector<2x128xbf16>
      %c0_15 = arith.constant 0 : index
      %c0_16 = arith.constant 0 : index
      %21 = vector.load %arg5[%c0_15, %c0_16] : memref<128x128xbf16, #tpu.memory_space<vmem>>, vector<128x128xbf16>
      %cst_17 = arith.constant dense<0.000000e+00> : vector<2x128xf32>
      %22 = tpu.matmul %20, %21, %cst_17 {dimension_numbers = #tpu.dot_dimension_numbers<[1], [0], [0], [1], [0, 0, 1, 1], [], []>} : vector<2x128xbf16>, vector<128x128xbf16>, vector<2x128xf32> -> vector<2x128xf32>
      %c0_18 = arith.constant 0 : index
      %c0_19 = arith.constant 0 : index
      %23 = vector.load %arg6[%c0_18, %c0_19] : memref<1x128xf32, #tpu.memory_space<vmem>>, vector<1x128xf32>
      %24 = vector.broadcast %23 : vector<1x128xf32> to vector<2x128xf32>
      %25 = arith.addf %22, %24 : vector<2x128xf32>
      %26 = tpu.iota {dimensions = array<i32: 1>} : vector<1x128xi32>
      %c31_i32 = arith.constant 31 : i32
      %27 = vector.broadcast %c31_i32 : i32 to vector<1x128xi32>
      %28 = arith.cmpi slt, %26, %27 : vector<1x128xi32>
      %cst_20 = arith.constant -1.000000e+30 : f32
      %29 = vector.shape_cast %28 : vector<1x128xi1> to vector<1x128xi1>
      %30 = vector.broadcast %29 : vector<1x128xi1> to vector<2x128xi1>
      %31 = vector.broadcast %cst_20 : f32 to vector<2x128xf32>
      %32 = arith.select %30, %25, %31 : vector<2x128xi1>, vector<2x128xf32>
      %cst_21 = arith.constant dense<0xFF800000> : vector<2xf32>
      %33 = vector.multi_reduction <maximumf>, %32, %cst_21 [1] : vector<2x128xf32> to vector<2xf32>
      %34 = vector.shape_cast %33 : vector<2xf32> to vector<2x1xf32>
      %35 = vector.broadcast %34 : vector<2x1xf32> to vector<2x128xf32>
      %36 = arith.subf %25, %35 : vector<2x128xf32>
      %37 = math.exp %36 : vector<2x128xf32>
      %cst_22 = arith.constant 1.000000e+00 : f32
      %38 = vector.broadcast %cst_22 : f32 to vector<2x128xf32>
      %c0_i32_23 = arith.constant 0 : i32
      %39 = vector.broadcast %c0_i32_23 : i32 to vector<1x128xi32>
      %40 = arith.cmpi sge, %26, %39 : vector<1x128xi32>
      %c10_i32 = arith.constant 10 : i32
      %41 = vector.broadcast %c10_i32 : i32 to vector<1x128xi32>
      %42 = arith.cmpi slt, %26, %41 : vector<1x128xi32>
      %43 = arith.andi %40, %42 : vector<1x128xi1>
      %cst_24 = arith.constant 0.000000e+00 : f32
      %44 = vector.shape_cast %43 : vector<1x128xi1> to vector<1x128xi1>
      %45 = vector.broadcast %44 : vector<1x128xi1> to vector<2x128xi1>
      %46 = vector.broadcast %cst_24 : f32 to vector<2x128xf32>
      %47 = arith.select %45, %37, %46 : vector<2x128xi1>, vector<2x128xf32>
      %cst_25 = arith.constant dense<0.000000e+00> : vector<2xf32>
      %48 = vector.multi_reduction <add>, %47, %cst_25 [1] : vector<2x128xf32> to vector<2xf32>
      %49 = vector.shape_cast %48 : vector<2xf32> to vector<2x1xf32>
      %50 = vector.shape_cast %43 : vector<1x128xi1> to vector<1x128xi1>
      %51 = vector.broadcast %50 : vector<1x128xi1> to vector<2x128xi1>
      %52 = vector.shape_cast %49 : vector<2x1xf32> to vector<2x1xf32>
      %53 = vector.broadcast %52 : vector<2x1xf32> to vector<2x128xf32>
      %54 = arith.select %51, %53, %38 : vector<2x128xi1>, vector<2x128xf32>
      %c10_i32_26 = arith.constant 10 : i32
      %55 = vector.broadcast %c10_i32_26 : i32 to vector<1x128xi32>
      %56 = arith.cmpi sge, %26, %55 : vector<1x128xi32>
      %c14_i32 = arith.constant 14 : i32
      %57 = vector.broadcast %c14_i32 : i32 to vector<1x128xi32>
      %58 = arith.cmpi slt, %26, %57 : vector<1x128xi32>
      %59 = arith.andi %56, %58 : vector<1x128xi1>
      %cst_27 = arith.constant 0.000000e+00 : f32
      %60 = vector.shape_cast %59 : vector<1x128xi1> to vector<1x128xi1>
      %61 = vector.broadcast %60 : vector<1x128xi1> to vector<2x128xi1>
      %62 = vector.broadcast %cst_27 : f32 to vector<2x128xf32>
      %63 = arith.select %61, %37, %62 : vector<2x128xi1>, vector<2x128xf32>
      %cst_28 = arith.constant dense<0.000000e+00> : vector<2xf32>
      %64 = vector.multi_reduction <add>, %63, %cst_28 [1] : vector<2x128xf32> to vector<2xf32>
      %65 = vector.shape_cast %64 : vector<2xf32> to vector<2x1xf32>
      %66 = vector.shape_cast %59 : vector<1x128xi1> to vector<1x128xi1>
      %67 = vector.broadcast %66 : vector<1x128xi1> to vector<2x128xi1>
      %68 = vector.shape_cast %65 : vector<2x1xf32> to vector<2x1xf32>
      %69 = vector.broadcast %68 : vector<2x1xf32> to vector<2x128xf32>
      %70 = arith.select %67, %69, %54 : vector<2x128xi1>, vector<2x128xf32>
      %c14_i32_29 = arith.constant 14 : i32
      %71 = vector.broadcast %c14_i32_29 : i32 to vector<1x128xi32>
      %72 = arith.cmpi sge, %26, %71 : vector<1x128xi32>
      %c19_i32 = arith.constant 19 : i32
      %73 = vector.broadcast %c19_i32 : i32 to vector<1x128xi32>
      %74 = arith.cmpi slt, %26, %73 : vector<1x128xi32>
      %75 = arith.andi %72, %74 : vector<1x128xi1>
      %cst_30 = arith.constant 0.000000e+00 : f32
      %76 = vector.shape_cast %75 : vector<1x128xi1> to vector<1x128xi1>
      %77 = vector.broadcast %76 : vector<1x128xi1> to vector<2x128xi1>
      %78 = vector.broadcast %cst_30 : f32 to vector<2x128xf32>
      %79 = arith.select %77, %37, %78 : vector<2x128xi1>, vector<2x128xf32>
      %cst_31 = arith.constant dense<0.000000e+00> : vector<2xf32>
      %80 = vector.multi_reduction <add>, %79, %cst_31 [1] : vector<2x128xf32> to vector<2xf32>
      %81 = vector.shape_cast %80 : vector<2xf32> to vector<2x1xf32>
      %82 = vector.shape_cast %75 : vector<1x128xi1> to vector<1x128xi1>
      %83 = vector.broadcast %82 : vector<1x128xi1> to vector<2x128xi1>
      %84 = vector.shape_cast %81 : vector<2x1xf32> to vector<2x1xf32>
      %85 = vector.broadcast %84 : vector<2x1xf32> to vector<2x128xf32>
      %86 = arith.select %83, %85, %70 : vector<2x128xi1>, vector<2x128xf32>
      %c19_i32_32 = arith.constant 19 : i32
      %87 = vector.broadcast %c19_i32_32 : i32 to vector<1x128xi32>
      %88 = arith.cmpi sge, %26, %87 : vector<1x128xi32>
      %c22_i32 = arith.constant 22 : i32
      %89 = vector.broadcast %c22_i32 : i32 to vector<1x128xi32>
      %90 = arith.cmpi slt, %26, %89 : vector<1x128xi32>
      %91 = arith.andi %88, %90 : vector<1x128xi1>
      %cst_33 = arith.constant 0.000000e+00 : f32
      %92 = vector.shape_cast %91 : vector<1x128xi1> to vector<1x128xi1>
      %93 = vector.broadcast %92 : vector<1x128xi1> to vector<2x128xi1>
      %94 = vector.broadcast %cst_33 : f32 to vector<2x128xf32>
      %95 = arith.select %93, %37, %94 : vector<2x128xi1>, vector<2x128xf32>
      %cst_34 = arith.constant dense<0.000000e+00> : vector<2xf32>
      %96 = vector.multi_reduction <add>, %95, %cst_34 [1] : vector<2x128xf32> to vector<2xf32>
      %97 = vector.shape_cast %96 : vector<2xf32> to vector<2x1xf32>
      %98 = vector.shape_cast %91 : vector<1x128xi1> to vector<1x128xi1>
      %99 = vector.broadcast %98 : vector<1x128xi1> to vector<2x128xi1>
      %100 = vector.shape_cast %97 : vector<2x1xf32> to vector<2x1xf32>
      %101 = vector.broadcast %100 : vector<2x1xf32> to vector<2x128xf32>
      %102 = arith.select %99, %101, %86 : vector<2x128xi1>, vector<2x128xf32>
      %c22_i32_35 = arith.constant 22 : i32
      %103 = vector.broadcast %c22_i32_35 : i32 to vector<1x128xi32>
      %104 = arith.cmpi sge, %26, %103 : vector<1x128xi32>
      %c25_i32 = arith.constant 25 : i32
      %105 = vector.broadcast %c25_i32 : i32 to vector<1x128xi32>
      %106 = arith.cmpi slt, %26, %105 : vector<1x128xi32>
      %107 = arith.andi %104, %106 : vector<1x128xi1>
      %cst_36 = arith.constant 0.000000e+00 : f32
      %108 = vector.shape_cast %107 : vector<1x128xi1> to vector<1x128xi1>
      %109 = vector.broadcast %108 : vector<1x128xi1> to vector<2x128xi1>
      %110 = vector.broadcast %cst_36 : f32 to vector<2x128xf32>
      %111 = arith.select %109, %37, %110 : vector<2x128xi1>, vector<2x128xf32>
      %cst_37 = arith.constant dense<0.000000e+00> : vector<2xf32>
      %112 = vector.multi_reduction <add>, %111, %cst_37 [1] : vector<2x128xf32> to vector<2xf32>
      %113 = vector.shape_cast %112 : vector<2xf32> to vector<2x1xf32>
      %114 = vector.shape_cast %107 : vector<1x128xi1> to vector<1x128xi1>
      %115 = vector.broadcast %114 : vector<1x128xi1> to vector<2x128xi1>
      %116 = vector.shape_cast %113 : vector<2x1xf32> to vector<2x1xf32>
      %117 = vector.broadcast %116 : vector<2x1xf32> to vector<2x128xf32>
      %118 = arith.select %115, %117, %102 : vector<2x128xi1>, vector<2x128xf32>
      %c25_i32_38 = arith.constant 25 : i32
      %119 = vector.broadcast %c25_i32_38 : i32 to vector<1x128xi32>
      %120 = arith.cmpi sge, %26, %119 : vector<1x128xi32>
      %c31_i32_39 = arith.constant 31 : i32
      %121 = vector.broadcast %c31_i32_39 : i32 to vector<1x128xi32>
      %122 = arith.cmpi slt, %26, %121 : vector<1x128xi32>
      %123 = arith.andi %120, %122 : vector<1x128xi1>
      %cst_40 = arith.constant 0.000000e+00 : f32
      %124 = vector.shape_cast %123 : vector<1x128xi1> to vector<1x128xi1>
      %125 = vector.broadcast %124 : vector<1x128xi1> to vector<2x128xi1>
      %126 = vector.broadcast %cst_40 : f32 to vector<2x128xf32>
      %127 = arith.select %125, %37, %126 : vector<2x128xi1>, vector<2x128xf32>
      %cst_41 = arith.constant dense<0.000000e+00> : vector<2xf32>
      %128 = vector.multi_reduction <add>, %127, %cst_41 [1] : vector<2x128xf32> to vector<2xf32>
      %129 = vector.shape_cast %128 : vector<2xf32> to vector<2x1xf32>
      %130 = vector.shape_cast %123 : vector<1x128xi1> to vector<1x128xi1>
      %131 = vector.broadcast %130 : vector<1x128xi1> to vector<2x128xi1>
      %132 = vector.shape_cast %129 : vector<2x1xf32> to vector<2x1xf32>
      %133 = vector.broadcast %132 : vector<2x1xf32> to vector<2x128xf32>
      %134 = arith.select %131, %133, %118 : vector<2x128xi1>, vector<2x128xf32>
      %135 = tpu.reciprocal %134 : vector<2x128xf32> -> vector<2x128xf32>
      %136 = arith.mulf %37, %135 : vector<2x128xf32>
      %cst_42 = arith.constant 0.000000e+00 : f32
      %137 = vector.shape_cast %28 : vector<1x128xi1> to vector<1x128xi1>
      %138 = vector.broadcast %137 : vector<1x128xi1> to vector<2x128xi1>
      %139 = vector.broadcast %cst_42 : f32 to vector<2x128xf32>
      %140 = arith.select %138, %136, %139 : vector<2x128xi1>, vector<2x128xf32>
      %c0_43 = arith.constant 0 : index
      %c0_44 = arith.constant 0 : index
      %141 = vector.load %arg7[%c0_43, %c0_44] : memref<2x128xf32, #tpu.memory_space<vmem>>, vector<2x128xf32>
      tpu.vector_store %arg7[%c0_43, %c0_44], %140 {strides = array<i32>} : memref<2x128xf32, #tpu.memory_space<vmem>>, vector<2x128xf32>,
    } else {
    }
    return
  }
  func.func @transform_0(%arg0: i32, %arg1: i32) -> (i32, i32) {
    %c0_i32 = arith.constant 0 : i32
    return %arg0, %arg1 : i32, i32
  }
  func.func @transform_1(%arg0: i32, %arg1: i32) -> (i32, i32) {
    %c0_i32 = arith.constant 0 : i32
    %c0_i32_0 = arith.constant 0 : i32
    return %arg1, %c0_i32 : i32, i32
  }
  func.func @transform_2(%arg0: i32, %arg1: i32) -> (i32, i32) {
    %c0_i32 = arith.constant 0 : i32
    %c0_i32_0 = arith.constant 0 : i32
    %c0_i32_1 = arith.constant 0 : i32
    return %c0_i32, %c0_i32_0 : i32, i32
  }
  func.func @transform_3(%arg0: i32, %arg1: i32) -> (i32, i32) {
    %c0_i32 = arith.constant 0 : i32
    %c0_i32_0 = arith.constant 0 : i32
    %c0_i32_1 = arith.constant 0 : i32
    return %c0_i32, %c0_i32_0 : i32, i32
  }
  func.func @transform_4(%arg0: i32, %arg1: i32) -> (i32, i32) {
    %c0_i32 = arith.constant 0 : i32
    %c0_i32_0 = arith.constant 0 : i32
    %c0_i32_1 = arith.constant 0 : i32
    return %c0_i32, %c0_i32_0 : i32, i32
  }
  func.func @transform_5(%arg0: i32, %arg1: i32) -> (i32, i32) {
    %c0_i32 = arith.constant 0 : i32
    %c0_i32_0 = arith.constant 0 : i32
    return %arg0, %c0_i32 : i32, i32
  }
}

</mosaic_0001>

<llo_original>
// kernel: tpu_custom_call.1
$region0: #{tpu_custom_call.1}
  #allocation0 [shape = 'u32[]', space=smem, size = 0x4, offset = 0x4, fixed_abs, tag = 'smem constant byte address 0x4 - core index']
  #allocation1 [shape = 'u32[144,128]{1,0:T(1,128)}', space=vmem, size = 0x12000, scoped, tag = 'internal scratch']
  #allocation2 [shape = 'f32[2,128]{1,0:T(2,128)}', space=vmem, size = 0x400, scoped, tag = 'scratch operand']
  %s0 = inlined_call_operand.hbm [shape: f32[2,1024], index: 0, kind: input, shape index: {}]
  %s1 = inlined_call_operand.hbm [shape: f32[1024,128], index: 1, kind: input, shape index: {}]
  %s2 = inlined_call_operand.vmem [shape: f32[1,128], index: 2, kind: input, shape index: {}]
  %s3 = inlined_call_operand.hbm [shape: bf16[128,128], index: 3, kind: input, shape index: {}]
  %s4 = inlined_call_operand.vmem [shape: f32[1,128], index: 4, kind: input, shape index: {}]
  %s5 = inlined_call_operand.hbm [shape: f32[2,128], index: 5, kind: output, shape index: {}]
  %s6 = sld [smem:[#allocation0]]
  $region50: #{tpu_custom_call.1} parent=0
    _
  %s8 = ssub.s32 1, %s6
  %s9 = scalar_select 0, %s8, %s6
  $region1: #{tpu_custom_call.1} parent=0
    #allocation3 [shape = 'u8[8192]{0}', space=vmem, size = 0x2000, scoped, tag = 'input window, operand 0, single buffered']
    #allocation4 [shape = 's32[1]{0}', space=sflag, size = 0x4, scoped, tag = 'scoped memory for tpu_custom_call.1']
    #allocation5 [shape = 's32[1]{0}', space=sflag, size = 0x4, scoped, tag = 'scoped memory for tpu_custom_call.1']
    #allocation6 [shape = 'u8[524288]{0}', space=vmem, size = 0x80000, scoped, tag = 'input window, operand 1, single buffered']
    #allocation7 [shape = 's32[1]{0}', space=sflag, size = 0x4, scoped, tag = 'scoped memory for tpu_custom_call.1']
    #allocation8 [shape = 'u8[32768]{0}', space=vmem, size = 0x8000, scoped, tag = 'input window, operand 3, single buffered']
    #allocation9 [shape = 'u8[1024]{0}', space=vmem, size = 0x400, scoped, tag = 'output window, operand 0, single buffered']
    %10 = vsyncpa [#allocation4], 0
    %11 = vsyncpa [#allocation7], 0
    %12 = vsyncpa [#allocation5], 0
    // Predicated region
    $region2: #{tpu_custom_call.1} parent=1 // pred_check
      _
    $region3: #{tpu_custom_call.1} parent=1 // pred_check_branch
      %14 = sbr.rel (0) target = $region5
    $region4: #{tpu_custom_call.1} parent=1 // pred_region
      %s16 = ssub.s32 256, 256
      %17 = vsyncadd [#allocation4], %s16
      %s19 = sshll.u32 [#allocation3], 4
      %s20 = int_to_ptr.vmem [resolvable:$true] %s19
      %22 = dma.hbm_to_vmem [thread:$0]  %s0, 256, %s20, [#allocation4]
    $region5: #{tpu_custom_call.1} parent=1 // pred_fallthru
      _
    // Predicated region
    $region6: #{tpu_custom_call.1} parent=1 // pred_check
      _
    $region7: #{tpu_custom_call.1} parent=1 // pred_check_branch
      %24 = sbr.rel (0) target = $region9
    $region8: #{tpu_custom_call.1} parent=1 // pred_region
      %s26 = ssub.s32 16384, 16384
      %27 = vsyncadd [#allocation7], %s26
      %s28 = sshll.u32 [#allocation6], 4
      %s29 = int_to_ptr.vmem [resolvable:$true] %s28
      %34 = dma.hbm_to_vmem [thread:$0]  %s1, 16384, %s29, [#allocation7], 128, 128, 8
    $region9: #{tpu_custom_call.1} parent=1 // pred_fallthru
      _
    // Predicated region
    $region10: #{tpu_custom_call.1} parent=1 // pred_check
      _
    $region11: #{tpu_custom_call.1} parent=1 // pred_check_branch
      %36 = sbr.rel (0) target = $region13
    $region12: #{tpu_custom_call.1} parent=1 // pred_region
      _
    $region13: #{tpu_custom_call.1} parent=1 // pred_fallthru
      _
    // Predicated region
    $region14: #{tpu_custom_call.1} parent=1 // pred_check
      _
    $region15: #{tpu_custom_call.1} parent=1 // pred_check_branch
      %38 = sbr.rel (0) target = $region17
    $region16: #{tpu_custom_call.1} parent=1 // pred_region
      %s40 = ssub.s32 1024, 1024
      %41 = vsyncadd [#allocation7], %s40
      %s42 = sshll.u32 [#allocation8], 4
      %s43 = int_to_ptr.vmem [resolvable:$true] %s42
      %48 = dma.hbm_to_vmem [thread:$0]  %s3, 1024, %s43, [#allocation7], 64, 64, 4
    $region17: #{tpu_custom_call.1} parent=1 // pred_fallthru
      _
    // Predicated region
    $region18: #{tpu_custom_call.1} parent=1 // pred_check
      _
    $region19: #{tpu_custom_call.1} parent=1 // pred_check_branch
      %50 = sbr.rel (0) target = $region21
    $region20: #{tpu_custom_call.1} parent=1 // pred_region
      _
    $region21: #{tpu_custom_call.1} parent=1 // pred_fallthru
      _
    // Predicated region
    $region22: #{tpu_custom_call.1} parent=1 // pred_check
      _
    $region23: #{tpu_custom_call.1} parent=1 // pred_check_branch
      %52 = sbr.rel (0) target = $region25
    $region24: #{tpu_custom_call.1} parent=1 // pred_region
      %53 = dma.done [#allocation4], 256
    $region25: #{tpu_custom_call.1} parent=1 // pred_fallthru
      _
    // Predicated region
    $region26: #{tpu_custom_call.1} parent=1 // pred_check
      _
    $region27: #{tpu_custom_call.1} parent=1 // pred_check_branch
      %55 = sbr.rel (0) target = $region29
    $region28: #{tpu_custom_call.1} parent=1 // pred_region
      %56 = dma.done [#allocation7], 16384
    $region29: #{tpu_custom_call.1} parent=1 // pred_fallthru
      _
    // Predicated region
    $region30: #{tpu_custom_call.1} parent=1 // pred_check
      _
    $region31: #{tpu_custom_call.1} parent=1 // pred_check_branch
      %58 = sbr.rel (0) target = $region33
    $region32: #{tpu_custom_call.1} parent=1 // pred_region
      %59 = dma.done [#allocation7], 1024
    $region33: #{tpu_custom_call.1} parent=1 // pred_fallthru
      _
    %p61 = scmp.eq.s32.totalorder 0, 0
    // Predicated region
    $region34: #{tpu_custom_call.1} parent=1 // pred_check
      %p62 = pneg %p61
    $region35: #{tpu_custom_call.1} parent=1 // pred_check_branch
      %64 = sbr.rel (%p62) target = $region37
    $region36: #{tpu_custom_call.1} parent=1 // pred_region
      %65 = vst [vmem:[#allocation2] sm:$0x3] 0.0
    $region37: #{tpu_custom_call.1} parent=1 // pred_fallthru
      _
    %v66 = vld [vmem:[#allocation2] sm:$0x3]
    %v67 = vld [vmem:[#allocation3] sm:$0xff]
    %v68 = vld [vmem:[#allocation3 + $0x8] sm:$0xff]
    %v71 = vcombine.high %v67, %v67
    %v73 = vunpack.c.l.s4 1983009808
    %v74 = vunpack.c.0.s8 %v73
    %v75 = vlaneseq
    %v76 = vshrl.u32 %v75, 7
    %v77 = vsub.s32 %v74, %v76
    %v78 = vrot.slane %v67, %v77
    %v80 = vunpack.c.l.s4 1983009808
    %v81 = vunpack.c.0.s8 %v80
    %v82 = vlaneseq
    %v83 = vshrl.u32 %v82, 7
    %v84 = vsub.s32 %v81, %v83
    %v85 = vrot.slane %v71, %v84
    %v86 = vcombine.high %v78, %v78
    %v87 = vcombine.high %v85, %v85
    %v88 = vcombine.high %v68, %v68
    %v90 = vunpack.c.l.s4 1983009808
    %v91 = vunpack.c.0.s8 %v90
    %v92 = vlaneseq
    %v93 = vshrl.u32 %v92, 7
    %v94 = vsub.s32 %v91, %v93
    %v95 = vrot.slane %v68, %v94
    %v97 = vunpack.c.l.s4 1983009808
    %v98 = vunpack.c.0.s8 %v97
    %v99 = vlaneseq
    %v100 = vshrl.u32 %v99, 7
    %v101 = vsub.s32 %v98, %v100
    %v102 = vrot.slane %v88, %v101
    %v103 = vcombine.high %v95, %v95
    %v104 = vcombine.high %v102, %v102
    %v113 = vpack.c.bf16 %v78, %v78
    %v114 = vpack.c.bf16 %v86, %v86
    %v115 = vpack.c.bf16 %v85, %v85
    %v116 = vpack.c.bf16 %v87, %v87
    %v117 = vpack.c.bf16 %v95, %v95
    %v118 = vpack.c.bf16 %v103, %v103
    %v119 = vpack.c.bf16 %v102, %v102
    %v120 = vpack.c.bf16 %v104, %v104
    %v121 = vld [vmem:[#allocation6] sm:$0xff]
    %v122 = vld [vmem:[#allocation6 + $0x8] sm:$0xff]
    %v123 = vld [vmem:[#allocation6 + $0x10] sm:$0xff]
    %v124 = vld [vmem:[#allocation6 + $0x18] sm:$0xff]
    %v125 = vld [vmem:[#allocation6 + $0x20] sm:$0xff]
    %v126 = vld [vmem:[#allocation6 + $0x28] sm:$0xff]
    %v127 = vld [vmem:[#allocation6 + $0x30] sm:$0xff]
    %v128 = vld [vmem:[#allocation6 + $0x38] sm:$0xff]
    %v129 = vld [vmem:[#allocation6 + $0x40] sm:$0xff]
    %v130 = vld [vmem:[#allocation6 + $0x48] sm:$0xff]
    %v131 = vld [vmem:[#allocation6 + $0x50] sm:$0xff]
    %v132 = vld [vmem:[#allocation6 + $0x58] sm:$0xff]
    %v133 = vld [vmem:[#allocation6 + $0x60] sm:$0xff]
    %v134 = vld [vmem:[#allocation6 + $0x68] sm:$0xff]
    %v135 = vld [vmem:[#allocation6 + $0x70] sm:$0xff]
    %v136 = vld [vmem:[#allocation6 + $0x78] sm:$0xff]
    %v137 = vld [vmem:[#allocation6 + $0x80] sm:$0xff]
    %v138 = vld [vmem:[#allocation6 + $0x88] sm:$0xff]
    %v139 = vld [vmem:[#allocation6 + $0x90] sm:$0xff]
    %v140 = vld [vmem:[#allocation6 + $0x98] sm:$0xff]
    %v141 = vld [vmem:[#allocation6 + $0xa0] sm:$0xff]
    %v142 = vld [vmem:[#allocation6 + $0xa8] sm:$0xff]
    %v143 = vld [vmem:[#allocation6 + $0xb0] sm:$0xff]
    %v144 = vld [vmem:[#allocation6 + $0xb8] sm:$0xff]
    %v145 = vld [vmem:[#allocation6 + $0xc0] sm:$0xff]
    %v146 = vld [vmem:[#allocation6 + $0xc8] sm:$0xff]
    %v147 = vld [vmem:[#allocation6 + $0xd0] sm:$0xff]
    %v148 = vld [vmem:[#allocation6 + $0xd8] sm:$0xff]
    %v149 = vld [vmem:[#allocation6 + $0xe0] sm:$0xff]
    %v150 = vld [vmem:[#allocation6 + $0xe8] sm:$0xff]
    %v151 = vld [vmem:[#allocation6 + $0xf0] sm:$0xff]
    %v152 = vld [vmem:[#allocation6 + $0xf8] sm:$0xff]
    %v153 = vld [vmem:[#allocation6 + $0x100] sm:$0xff]
    %v154 = vld [vmem:[#allocation6 + $0x108] sm:$0xff]
    %v155 = vld [vmem:[#allocation6 + $0x110] sm:$0xff]
    %v156 = vld [vmem:[#allocation6 + $0x118] sm:$0xff]
    %v157 = vld [vmem:[#allocation6 + $0x120] sm:$0xff]
    %v158 = vld [vmem:[#allocation6 + $0x128] sm:$0xff]
    %v159 = vld [vmem:[#allocation6 + $0x130] sm:$0xff]
    %v160 = vld [vmem:[#allocation6 + $0x138] sm:$0xff]
    %v161 = vld [vmem:[#allocation6 + $0x140] sm:$0xff]
    %v162 = vld [vmem:[#allocation6 + $0x148] sm:$0xff]
    %v163 = vld [vmem:[#allocation6 + $0x150] sm:$0xff]
    %v164 = vld [vmem:[#allocation6 + $0x158] sm:$0xff]
    %v165 = vld [vmem:[#allocation6 + $0x160] sm:$0xff]
    %v166 = vld [vmem:[#allocation6 + $0x168] sm:$0xff]
    %v167 = vld [vmem:[#allocation6 + $0x170] sm:$0xff]
    %v168 = vld [vmem:[#allocation6 + $0x178] sm:$0xff]
    %v169 = vld [vmem:[#allocation6 + $0x180] sm:$0xff]
    %v170 = vld [vmem:[#allocation6 + $0x188] sm:$0xff]
    %v171 = vld [vmem:[#allocation6 + $0x190] sm:$0xff]
    %v172 = vld [vmem:[#allocation6 + $0x198] sm:$0xff]
    %v173 = vld [vmem:[#allocation6 + $0x1a0] sm:$0xff]
    %v174 = vld [vmem:[#allocation6 + $0x1a8] sm:$0xff]
    %v175 = vld [vmem:[#allocation6 + $0x1b0] sm:$0xff]
    %v176 = vld [vmem:[#allocation6 + $0x1b8] sm:$0xff]
    %v177 = vld [vmem:[#allocation6 + $0x1c0] sm:$0xff]
    %v178 = vld [vmem:[#allocation6 + $0x1c8] sm:$0xff]
    %v179 = vld [vmem:[#allocation6 + $0x1d0] sm:$0xff]
    %v180 = vld [vmem:[#allocation6 + $0x1d8] sm:$0xff]
    %v181 = vld [vmem:[#allocation6 + $0x1e0] sm:$0xff]
    %v182 = vld [vmem:[#allocation6 + $0x1e8] sm:$0xff]
    %v183 = vld [vmem:[#allocation6 + $0x1f0] sm:$0xff]
    %v184 = vld [vmem:[#allocation6 + $0x1f8] sm:$0xff]
    %v185 = vld [vmem:[#allocation6 + $0x200] sm:$0xff]
    %v186 = vld [vmem:[#allocation6 + $0x208] sm:$0xff]
    %v187 = vld [vmem:[#allocation6 + $0x210] sm:$0xff]
    %v188 = vld [vmem:[#allocation6 + $0x218] sm:$0xff]
    %v189 = vld [vmem:[#allocation6 + $0x220] sm:$0xff]
    %v190 = vld [vmem:[#allocation6 + $0x228] sm:$0xff]
    %v191 = vld [vmem:[#allocation6 + $0x230] sm:$0xff]
    %v192 = vld [vmem:[#allocation6 + $0x238] sm:$0xff]
    %v193 = vld [vmem:[#allocation6 + $0x240] sm:$0xff]
    %v194 = vld [vmem:[#allocation6 + $0x248] sm:$0xff]
    %v195 = vld [vmem:[#allocation6 + $0x250] sm:$0xff]
    %v196 = vld [vmem:[#allocation6 + $0x258] sm:$0xff]
    %v197 = vld [vmem:[#allocation6 + $0x260] sm:$0xff]
    %v198 = vld [vmem:[#allocation6 + $0x268] sm:$0xff]
    %v199 = vld [vmem:[#allocation6 + $0x270] sm:$0xff]
    %v200 = vld [vmem:[#allocation6 + $0x278] sm:$0xff]
    %v201 = vld [vmem:[#allocation6 + $0x280] sm:$0xff]
    %v202 = vld [vmem:[#allocation6 + $0x288] sm:$0xff]
    %v203 = vld [vmem:[#allocation6 + $0x290] sm:$0xff]
    %v204 = vld [vmem:[#allocation6 + $0x298] sm:$0xff]
    %v205 = vld [vmem:[#allocation6 + $0x2a0] sm:$0xff]
    %v206 = vld [vmem:[#allocation6 + $0x2a8] sm:$0xff]
    %v207 = vld [vmem:[#allocation6 + $0x2b0] sm:$0xff]
    %v208 = vld [vmem:[#allocation6 + $0x2b8] sm:$0xff]
    %v209 = vld [vmem:[#allocation6 + $0x2c0] sm:$0xff]
    %v210 = vld [vmem:[#allocation6 + $0x2c8] sm:$0xff]
    %v211 = vld [vmem:[#allocation6 + $0x2d0] sm:$0xff]
    %v212 = vld [vmem:[#allocation6 + $0x2d8] sm:$0xff]
    %v213 = vld [vmem:[#allocation6 + $0x2e0] sm:$0xff]
    %v214 = vld [vmem:[#allocation6 + $0x2e8] sm:$0xff]
    %v215 = vld [vmem:[#allocation6 + $0x2f0] sm:$0xff]
    %v216 = vld [vmem:[#allocation6 + $0x2f8] sm:$0xff]
    %v217 = vld [vmem:[#allocation6 + $0x300] sm:$0xff]
    %v218 = vld [vmem:[#allocation6 + $0x308] sm:$0xff]
    %v219 = vld [vmem:[#allocation6 + $0x310] sm:$0xff]
    %v220 = vld [vmem:[#allocation6 + $0x318] sm:$0xff]
    %v221 = vld [vmem:[#allocation6 + $0x320] sm:$0xff]
    %v222 = vld [vmem:[#allocation6 + $0x328] sm:$0xff]
    %v223 = vld [vmem:[#allocation6 + $0x330] sm:$0xff]
    %v224 = vld [vmem:[#allocation6 + $0x338] sm:$0xff]
    %v225 = vld [vmem:[#allocation6 + $0x340] sm:$0xff]
    %v226 = vld [vmem:[#allocation6 + $0x348] sm:$0xff]
    %v227 = vld [vmem:[#allocation6 + $0x350] sm:$0xff]
    %v228 = vld [vmem:[#allocation6 + $0x358] sm:$0xff]
    %v229 = vld [vmem:[#allocation6 + $0x360] sm:$0xff]
    %v230 = vld [vmem:[#allocation6 + $0x368] sm:$0xff]
    %v231 = vld [vmem:[#allocation6 + $0x370] sm:$0xff]
    %v232 = vld [vmem:[#allocation6 + $0x378] sm:$0xff]
    %v233 = vld [vmem:[#allocation6 + $0x380] sm:$0xff]
    %v234 = vld [vmem:[#allocation6 + $0x388] sm:$0xff]
    %v235 = vld [vmem:[#allocation6 + $0x390] sm:$0xff]
    %v236 = vld [vmem:[#allocation6 + $0x398] sm:$0xff]
    %v237 = vld [vmem:[#allocation6 + $0x3a0] sm:$0xff]
    %v238 = vld [vmem:[#allocation6 + $0x3a8] sm:$0xff]
    %v239 = vld [vmem:[#allocation6 + $0x3b0] sm:$0xff]
    %v240 = vld [vmem:[#allocation6 + $0x3b8] sm:$0xff]
    %v241 = vld [vmem:[#allocation6 + $0x3c0] sm:$0xff]
    %v242 = vld [vmem:[#allocation6 + $0x3c8] sm:$0xff]
    %v243 = vld [vmem:[#allocation6 + $0x3d0] sm:$0xff]
    %v244 = vld [vmem:[#allocation6 + $0x3d8] sm:$0xff]
    %v245 = vld [vmem:[#allocation6 + $0x3e0] sm:$0xff]
    %v246 = vld [vmem:[#allocation6 + $0x3e8] sm:$0xff]
    %v247 = vld [vmem:[#allocation6 + $0x3f0] sm:$0xff]
    %v248 = vld [vmem:[#allocation6 + $0x3f8] sm:$0xff]
    %v249 = vpack.c.bf16 %v122, %v121
    %v250 = vpack.c.bf16 %v124, %v123
    %v251 = vpack.c.bf16 %v126, %v125
    %v252 = vpack.c.bf16 %v128, %v127
    %v253 = vpack.c.bf16 %v130, %v129
    %v254 = vpack.c.bf16 %v132, %v131
    %v255 = vpack.c.bf16 %v134, %v133
    %v256 = vpack.c.bf16 %v136, %v135
    %v257 = vpack.c.bf16 %v138, %v137
    %v258 = vpack.c.bf16 %v140, %v139
    %v259 = vpack.c.bf16 %v142, %v141
    %v260 = vpack.c.bf16 %v144, %v143
    %v261 = vpack.c.bf16 %v146, %v145
    %v262 = vpack.c.bf16 %v148, %v147
    %v263 = vpack.c.bf16 %v150, %v149
    %v264 = vpack.c.bf16 %v152, %v151
    %v265 = vpack.c.bf16 %v154, %v153
    %v266 = vpack.c.bf16 %v156, %v155
    %v267 = vpack.c.bf16 %v158, %v157
    %v268 = vpack.c.bf16 %v160, %v159
    %v269 = vpack.c.bf16 %v162, %v161
    %v270 = vpack.c.bf16 %v164, %v163
    %v271 = vpack.c.bf16 %v166, %v165
    %v272 = vpack.c.bf16 %v168, %v167
    %v273 = vpack.c.bf16 %v170, %v169
    %v274 = vpack.c.bf16 %v172, %v171
    %v275 = vpack.c.bf16 %v174, %v173
    %v276 = vpack.c.bf16 %v176, %v175
    %v277 = vpack.c.bf16 %v178, %v177
    %v278 = vpack.c.bf16 %v180, %v179
    %v279 = vpack.c.bf16 %v182, %v181
    %v280 = vpack.c.bf16 %v184, %v183
    %v281 = vpack.c.bf16 %v186, %v185
    %v282 = vpack.c.bf16 %v188, %v187
    %v283 = vpack.c.bf16 %v190, %v189
    %v284 = vpack.c.bf16 %v192, %v191
    %v285 = vpack.c.bf16 %v194, %v193
    %v286 = vpack.c.bf16 %v196, %v195
    %v287 = vpack.c.bf16 %v198, %v197
    %v288 = vpack.c.bf16 %v200, %v199
    %v289 = vpack.c.bf16 %v202, %v201
    %v290 = vpack.c.bf16 %v204, %v203
    %v291 = vpack.c.bf16 %v206, %v205
    %v292 = vpack.c.bf16 %v208, %v207
    %v293 = vpack.c.bf16 %v210, %v209
    %v294 = vpack.c.bf16 %v212, %v211
    %v295 = vpack.c.bf16 %v214, %v213
    %v296 = vpack.c.bf16 %v216, %v215
    %v297 = vpack.c.bf16 %v218, %v217
    %v298 = vpack.c.bf16 %v220, %v219
    %v299 = vpack.c.bf16 %v222, %v221
    %v300 = vpack.c.bf16 %v224, %v223
    %v301 = vpack.c.bf16 %v226, %v225
    %v302 = vpack.c.bf16 %v228, %v227
    %v303 = vpack.c.bf16 %v230, %v229
    %v304 = vpack.c.bf16 %v232, %v231
    %v305 = vpack.c.bf16 %v234, %v233
    %v306 = vpack.c.bf16 %v236, %v235
    %v307 = vpack.c.bf16 %v238, %v237
    %v308 = vpack.c.bf16 %v240, %v239
    %v309 = vpack.c.bf16 %v242, %v241
    %v310 = vpack.c.bf16 %v244, %v243
    %v311 = vpack.c.bf16 %v246, %v245
    %v312 = vpack.c.bf16 %v248, %v247
    %313 = vmatprep.subr.bf16.mxu0 0
    %314 = vmatpush1.bf16.msra.mxu0 %v249
    %315 = vmatprep.subr.bf16.mxu0 0
    %316 = vmatpush1.bf16.msra.mxu0 %v250
    %317 = vmatprep.subr.bf16.mxu0 0
    %318 = vmatpush1.bf16.msra.mxu0 %v251
    %319 = vmatprep.subr.bf16.mxu0 0
    %320 = vmatpush1.bf16.msra.mxu0 %v252
    %321 = vmatprep.subr.bf16.mxu0 0
    %322 = vmatpush1.bf16.msra.mxu0 %v253
    %323 = vmatprep.subr.bf16.mxu0 0
    %324 = vmatpush1.bf16.msra.mxu0 %v254
    %325 = vmatprep.subr.bf16.mxu0 0
    %326 = vmatpush1.bf16.msra.mxu0 %v255
    %327 = vmatprep.subr.bf16.mxu0 0
    %328 = vmatpush1.bf16.msra.mxu0 %v256
    %329 = vmatprep.subr.bf16.mxu0 0
    %330 = vmatpush1.bf16.msra.mxu0 %v257
    %331 = vmatprep.subr.bf16.mxu0 0
    %332 = vmatpush1.bf16.msra.mxu0 %v258
    %333 = vmatprep.subr.bf16.mxu0 0
    %334 = vmatpush1.bf16.msra.mxu0 %v259
    %335 = vmatprep.subr.bf16.mxu0 0
    %336 = vmatpush1.bf16.msra.mxu0 %v260
    %337 = vmatprep.subr.bf16.mxu0 0
    %338 = vmatpush1.bf16.msra.mxu0 %v261
    %339 = vmatprep.subr.bf16.mxu0 0
    %340 = vmatpush1.bf16.msra.mxu0 %v262
    %341 = vmatprep.subr.bf16.mxu0 0
    %342 = vmatpush1.bf16.msra.mxu0 %v263
    %343 = vmatprep.subr.bf16.mxu0 0
    %344 = vmatpush1.bf16.msra.mxu0 %v264
    %345 = vmatprep.mubr.bf16.mxu0 %v114
    %346 = vmatmul.mubr.bf16.gmra.mrb[0].mxu0 %v113
    %v347 = vpop.f32.mrb[0].mxu0
    %v348 = vadd.f32 0.0, %v347
    %v349 = vpop.f32.mrb[0].mxu0
    %v350 = vpop.f32.mrb[0].mxu0
    %v351 = vpop.f32.mrb[0].mxu0
    %352 = vdwg.mxu0
    %353 = vmatprep.subr.bf16.mxu0 0
    %354 = vmatpush1.bf16.msra.mxu0 %v265
    %355 = vmatprep.subr.bf16.mxu0 0
    %356 = vmatpush1.bf16.msra.mxu0 %v266
    %357 = vmatprep.subr.bf16.mxu0 0
    %358 = vmatpush1.bf16.msra.mxu0 %v267
    %359 = vmatprep.subr.bf16.mxu0 0
    %360 = vmatpush1.bf16.msra.mxu0 %v268
    %361 = vmatprep.subr.bf16.mxu0 0
    %362 = vmatpush1.bf16.msra.mxu0 %v269
    %363 = vmatprep.subr.bf16.mxu0 0
    %364 = vmatpush1.bf16.msra.mxu0 %v270
    %365 = vmatprep.subr.bf16.mxu0 0
    %366 = vmatpush1.bf16.msra.mxu0 %v271
    %367 = vmatprep.subr.bf16.mxu0 0
    %368 = vmatpush1.bf16.msra.mxu0 %v272
    %369 = vmatprep.subr.bf16.mxu0 0
    %370 = vmatpush1.bf16.msra.mxu0 %v273
    %371 = vmatprep.subr.bf16.mxu0 0
    %372 = vmatpush1.bf16.msra.mxu0 %v274
    %373 = vmatprep.subr.bf16.mxu0 0
    %374 = vmatpush1.bf16.msra.mxu0 %v275
    %375 = vmatprep.subr.bf16.mxu0 0
    %376 = vmatpush1.bf16.msra.mxu0 %v276
    %377 = vmatprep.subr.bf16.mxu0 0
    %378 = vmatpush1.bf16.msra.mxu0 %v277
    %379 = vmatprep.subr.bf16.mxu0 0
    %380 = vmatpush1.bf16.msra.mxu0 %v278
    %381 = vmatprep.subr.bf16.mxu0 0
    %382 = vmatpush1.bf16.msra.mxu0 %v279
    %383 = vmatprep.subr.bf16.mxu0 0
    %384 = vmatpush1.bf16.msra.mxu0 %v280
    %385 = vmatprep.mubr.bf16.mxu0 %v116
    %386 = vmatmul.mubr.bf16.gmra.mrb[0].mxu0 %v115
    %v387 = vpop.f32.mrb[0].mxu0
    %v388 = vadd.f32 %v348, %v387
    %v389 = vpop.f32.mrb[0].mxu0
    %v390 = vpop.f32.mrb[0].mxu0
    %v391 = vpop.f32.mrb[0].mxu0
    %392 = vdwg.mxu0
    %393 = vmatprep.subr.bf16.mxu0 0
    %394 = vmatpush1.bf16.msra.mxu0 %v281
    %395 = vmatprep.subr.bf16.mxu0 0
    %396 = vmatpush1.bf16.msra.mxu0 %v282
    %397 = vmatprep.subr.bf16.mxu0 0
    %398 = vmatpush1.bf16.msra.mxu0 %v283
    %399 = vmatprep.subr.bf16.mxu0 0
    %400 = vmatpush1.bf16.msra.mxu0 %v284
    %401 = vmatprep.subr.bf16.mxu0 0
    %402 = vmatpush1.bf16.msra.mxu0 %v285
    %403 = vmatprep.subr.bf16.mxu0 0
    %404 = vmatpush1.bf16.msra.mxu0 %v286
    %405 = vmatprep.subr.bf16.mxu0 0
    %406 = vmatpush1.bf16.msra.mxu0 %v287
    %407 = vmatprep.subr.bf16.mxu0 0
    %408 = vmatpush1.bf16.msra.mxu0 %v288
    %409 = vmatprep.subr.bf16.mxu0 0
    %410 = vmatpush1.bf16.msra.mxu0 %v289
    %411 = vmatprep.subr.bf16.mxu0 0
    %412 = vmatpush1.bf16.msra.mxu0 %v290
    %413 = vmatprep.subr.bf16.mxu0 0
    %414 = vmatpush1.bf16.msra.mxu0 %v291
    %415 = vmatprep.subr.bf16.mxu0 0
    %416 = vmatpush1.bf16.msra.mxu0 %v292
    %417 = vmatprep.subr.bf16.mxu0 0
    %418 = vmatpush1.bf16.msra.mxu0 %v293
    %419 = vmatprep.subr.bf16.mxu0 0
    %420 = vmatpush1.bf16.msra.mxu0 %v294
    %421 = vmatprep.subr.bf16.mxu0 0
    %422 = vmatpush1.bf16.msra.mxu0 %v295
    %423 = vmatprep.subr.bf16.mxu0 0
    %424 = vmatpush1.bf16.msra.mxu0 %v296
    %425 = vmatprep.mubr.bf16.mxu0 %v118
    %426 = vmatmul.mubr.bf16.gmra.mrb[0].mxu0 %v117
    %v427 = vpop.f32.mrb[0].mxu0
    %v428 = vadd.f32 %v388, %v427
    %v429 = vpop.f32.mrb[0].mxu0
    %v430 = vpop.f32.mrb[0].mxu0
    %v431 = vpop.f32.mrb[0].mxu0
    %432 = vdwg.mxu0
    %433 = vmatprep.subr.bf16.mxu0 0
    %434 = vmatpush1.bf16.msra.mxu0 %v297
    %435 = vmatprep.subr.bf16.mxu0 0
    %436 = vmatpush1.bf16.msra.mxu0 %v298
    %437 = vmatprep.subr.bf16.mxu0 0
    %438 = vmatpush1.bf16.msra.mxu0 %v299
    %439 = vmatprep.subr.bf16.mxu0 0
    %440 = vmatpush1.bf16.msra.mxu0 %v300
    %441 = vmatprep.subr.bf16.mxu0 0
    %442 = vmatpush1.bf16.msra.mxu0 %v301
    %443 = vmatprep.subr.bf16.mxu0 0
    %444 = vmatpush1.bf16.msra.mxu0 %v302
    %445 = vmatprep.subr.bf16.mxu0 0
    %446 = vmatpush1.bf16.msra.mxu0 %v303
    %447 = vmatprep.subr.bf16.mxu0 0
    %448 = vmatpush1.bf16.msra.mxu0 %v304
    %449 = vmatprep.subr.bf16.mxu0 0
    %450 = vmatpush1.bf16.msra.mxu0 %v305
    %451 = vmatprep.subr.bf16.mxu0 0
    %452 = vmatpush1.bf16.msra.mxu0 %v306
    %453 = vmatprep.subr.bf16.mxu0 0
    %454 = vmatpush1.bf16.msra.mxu0 %v307
    %455 = vmatprep.subr.bf16.mxu0 0
    %456 = vmatpush1.bf16.msra.mxu0 %v308
    %457 = vmatprep.subr.bf16.mxu0 0
    %458 = vmatpush1.bf16.msra.mxu0 %v309
    %459 = vmatprep.subr.bf16.mxu0 0
    %460 = vmatpush1.bf16.msra.mxu0 %v310
    %461 = vmatprep.subr.bf16.mxu0 0
    %462 = vmatpush1.bf16.msra.mxu0 %v311
    %463 = vmatprep.subr.bf16.mxu0 0
    %464 = vmatpush1.bf16.msra.mxu0 %v312
    %465 = vmatprep.mubr.bf16.mxu0 %v120
    %466 = vmatmul.mubr.bf16.gmra.mrb[0].mxu0 %v119
    %v467 = vpop.f32.mrb[0].mxu0
    %v468 = vadd.f32 %v428, %v467
    %v469 = vpop.f32.mrb[0].mxu0
    %v470 = vpop.f32.mrb[0].mxu0
    %v471 = vpop.f32.mrb[0].mxu0
    %472 = vdwg.mxu0
    %v473 = vadd.f32 %v66, %v468
    %474 = vst [vmem:[#allocation2] sm:$0x3] %v473
    // Predicated region
    $region38: #{tpu_custom_call.1} parent=1 // pred_check
      %p475 = pneg %p61
    $region39: #{tpu_custom_call.1} parent=1 // pred_check_branch
      %477 = sbr.rel (%p475) target = $region41
    $region40: #{tpu_custom_call.1} parent=1 // pred_region
      %v478 = vld [vmem:[#allocation2] sm:$0x3]
      %v479 = vld [vmem:[%s2] sm:$0x1]
      %v481 = vlaneseq
      %v482 = vshrl.u32 %v481, 7
      %v483 = vsub.s32 0, %v482
      %v484 = vrot.slane %v479, %v483
      %v486 = vadd.f32 %v478, %v484
      %v487 = vmax.f32 %v486, 0.0
      %v488 = vpack.c.bf16 %v487, %v487
      %v489 = vld [vmem:[#allocation8] sm:$0xf]
      %v490 = vld [vmem:[#allocation8 + $0x4] sm:$0xf]
      %v491 = vld [vmem:[#allocation8 + $0x8] sm:$0xf]
      %v492 = vld [vmem:[#allocation8 + $0xc] sm:$0xf]
      %v493 = vld [vmem:[#allocation8 + $0x10] sm:$0xf]
      %v494 = vld [vmem:[#allocation8 + $0x14] sm:$0xf]
      %v495 = vld [vmem:[#allocation8 + $0x18] sm:$0xf]
      %v496 = vld [vmem:[#allocation8 + $0x1c] sm:$0xf]
      %v497 = vld [vmem:[#allocation8 + $0x20] sm:$0xf]
      %v498 = vld [vmem:[#allocation8 + $0x24] sm:$0xf]
      %v499 = vld [vmem:[#allocation8 + $0x28] sm:$0xf]
      %v500 = vld [vmem:[#allocation8 + $0x2c] sm:$0xf]
      %v501 = vld [vmem:[#allocation8 + $0x30] sm:$0xf]
      %v502 = vld [vmem:[#allocation8 + $0x34] sm:$0xf]
      %v503 = vld [vmem:[#allocation8 + $0x38] sm:$0xf]
      %v504 = vld [vmem:[#allocation8 + $0x3c] sm:$0xf]
      %v505 = vld [vmem:[%s4] sm:$0x1]
      %v507 = vlaneseq
      %v508 = vshrl.u32 %v507, 7
      %v509 = vsub.s32 0, %v508
      %v510 = vrot.slane %v505, %v509
      %v528 = vunpack.c.l.b16 %v489
      %v529 = vunpack.c.l.b16 %v490
      %v530 = vunpack.c.l.b16 %v491
      %v531 = vunpack.c.l.b16 %v492
      %v532 = vunpack.c.l.b16 %v493
      %v533 = vunpack.c.l.b16 %v494
      %v534 = vunpack.c.l.b16 %v495
      %v535 = vunpack.c.l.b16 %v496
      %v536 = vunpack.c.l.b16 %v497
      %v537 = vunpack.c.l.b16 %v498
      %v538 = vunpack.c.l.b16 %v499
      %v539 = vunpack.c.l.b16 %v500
      %v540 = vunpack.c.l.b16 %v501
      %v541 = vunpack.c.l.b16 %v502
      %v542 = vunpack.c.l.b16 %v503
      %v543 = vunpack.c.l.b16 %v504
      %v544 = vpack.c.b16 %v529, %v528
      %v545 = vpack.c.b16 %v531, %v530
      %v546 = vpack.c.b16 %v533, %v532
      %v547 = vpack.c.b16 %v535, %v534
      %v548 = vpack.c.b16 %v537, %v536
      %v549 = vpack.c.b16 %v539, %v538
      %v550 = vpack.c.b16 %v541, %v540
      %v551 = vpack.c.b16 %v543, %v542
      %560 = vmatprep.subr.bf16.mxu0 0
      %561 = vmatpush1.bf16.msra.mxu0 %v544
      %562 = vmatprep.subr.bf16.mxu0 0
      %563 = vmatpush1.bf16.msra.mxu0 %v545
      %564 = vmatprep.subr.bf16.mxu0 0
      %565 = vmatpush1.bf16.msra.mxu0 %v546
      %566 = vmatprep.subr.bf16.mxu0 0
      %567 = vmatpush1.bf16.msra.mxu0 %v547
      %568 = vmatprep.subr.bf16.mxu0 0
      %569 = vmatpush1.bf16.msra.mxu0 %v548
      %570 = vmatprep.subr.bf16.mxu0 0
      %571 = vmatpush1.bf16.msra.mxu0 %v549
      %572 = vmatprep.subr.bf16.mxu0 0
      %573 = vmatpush1.bf16.msra.mxu0 %v550
      %574 = vmatprep.subr.bf16.mxu0 0
      %575 = vmatpush1.bf16.msra.mxu0 %v551
      %576 = vmatprep.subr.bf16.mxu0 0
      %577 = vmatpush1.bf16.msra.mxu0 0
      %578 = vmatprep.subr.bf16.mxu0 0
      %579 = vmatpush1.bf16.msra.mxu0 0
      %580 = vmatprep.subr.bf16.mxu0 0
      %581 = vmatpush1.bf16.msra.mxu0 0
      %582 = vmatprep.subr.bf16.mxu0 0
      %583 = vmatpush1.bf16.msra.mxu0 0
      %584 = vmatprep.subr.bf16.mxu0 0
      %585 = vmatpush1.bf16.msra.mxu0 0
      %586 = vmatprep.subr.bf16.mxu0 0
      %587 = vmatpush1.bf16.msra.mxu0 0
      %588 = vmatprep.subr.bf16.mxu0 0
      %589 = vmatpush1.bf16.msra.mxu0 0
      %590 = vmatprep.subr.bf16.mxu0 0
      %591 = vmatpush1.bf16.msra.mxu0 0
      %592 = vmatprep.mubr.bf16.mxu0 0
      %593 = vmatmul.mubr.bf16.gmra.mrb[0].mxu0 %v488
      %v594 = vpop.f32.mrb[0].mxu0
      %v595 = vadd.f32 %v510, %v594
      %v596 = vpop.f32.mrb[0].mxu0
      %v597 = vpop.f32.mrb[0].mxu0
      %v598 = vpop.f32.mrb[0].mxu0
      %599 = vdwg.mxu0
      %v600 = vlaneseq
      %v601 = vand.u32 %v600, 127
      %vm602 = vcmp.lt.s32.totalorder %v601, 31
      %v603 = vsel %vm602, 1, 0
      %vm604 = vcmp.eq.s32.totalorder %v603, 1
      %v605 = vsel %vm604, %v595, -1e+30
      %vm606 = vcmask 1041408
      %v607 = vsel %vm606, %v605, -inf
      %608 = vmax.xlane.f32.xlu0 %v607
      %v609 = vpop.xlane.xlu0 %608
      %v610 = vsub.f32 %v595, %v609
      %v611 = vmul.f32 %v610, 1.442695
      %v612 = vpow.pop %v611
      %vm613 = vcmp.ge.s32.totalorder %v601, 0
      %vm614 = vcmp.lt.s32.totalorder %v601, 10
      %vm615 = vmand %vm613, %vm614
      %v616 = vsel %vm615, 1, 0
      %vm617 = vcmp.eq.s32.totalorder %v616, 1
      %v618 = vsel %vm617, %v612, 0.0
      %v619 = vsel %vm606, %v618, 0.0
      %620 = vadd.xlane.f32.xlu0 %v619
      %v621 = vpop.xlane.xlu0 %620
      %v622 = vsel %vm617, %v621, 1.0
      %vm623 = vcmp.ge.s32.totalorder %v601, 10
      %vm624 = vcmp.lt.s32.totalorder %v601, 14
      %vm625 = vmand %vm623, %vm624
      %v626 = vsel %vm625, 1, 0
      %vm627 = vcmp.eq.s32.totalorder %v626, 1
      %v628 = vsel %vm627, %v612, 0.0
      %v629 = vsel %vm606, %v628, 0.0
      %630 = vadd.xlane.f32.xlu0 %v629
      %v631 = vpop.xlane.xlu0 %630
      %v632 = vsel %vm627, %v631, %v622
      %vm633 = vcmp.ge.s32.totalorder %v601, 14
      %vm634 = vcmp.lt.s32.totalorder %v601, 19
      %vm635 = vmand %vm633, %vm634
      %v636 = vsel %vm635, 1, 0
      %vm637 = vcmp.eq.s32.totalorder %v636, 1
      %v638 = vsel %vm637, %v612, 0.0
      %v639 = vsel %vm606, %v638, 0.0
      %640 = vadd.xlane.f32.xlu0 %v639
      %v641 = vpop.xlane.xlu0 %640
      %v642 = vsel %vm637, %v641, %v632
      %vm643 = vcmp.ge.s32.totalorder %v601, 19
      %vm644 = vcmp.lt.s32.totalorder %v601, 22
      %vm645 = vmand %vm643, %vm644
      %v646 = vsel %vm645, 1, 0
      %vm647 = vcmp.eq.s32.totalorder %v646, 1
      %v648 = vsel %vm647, %v612, 0.0
      %v649 = vsel %vm606, %v648, 0.0
      %650 = vadd.xlane.f32.xlu0 %v649
      %v651 = vpop.xlane.xlu0 %650
      %v652 = vsel %vm647, %v651, %v642
      %vm653 = vcmp.ge.s32.totalorder %v601, 22
      %vm654 = vcmp.lt.s32.totalorder %v601, 25
      %vm655 = vmand %vm653, %vm654
      %v656 = vsel %vm655, 1, 0
      %vm657 = vcmp.eq.s32.totalorder %v656, 1
      %v658 = vsel %vm657, %v612, 0.0
      %v659 = vsel %vm606, %v658, 0.0
      %660 = vadd.xlane.f32.xlu0 %v659
      %v661 = vpop.xlane.xlu0 %660
      %v662 = vsel %vm657, %v661, %v652
      %vm663 = vcmp.ge.s32.totalorder %v601, 25
      %vm664 = vmand %vm663, %vm602
      %v665 = vsel %vm664, 1, 0
      %vm666 = vcmp.eq.s32.totalorder %v665, 1
      %v667 = vsel %vm666, %v612, 0.0
      %v668 = vsel %vm606, %v667, 0.0
      %669 = vadd.xlane.f32.xlu0 %v668
      %v670 = vpop.xlane.xlu0 %669
      %v671 = vsel %vm666, %v670, %v662
      %v672 = vrcp.pop %v671
      %v673 = vmul.f32 %v612, %v672
      %v674 = vsel %vm604, %v673, 0.0
      %675 = vst [vmem:[#allocation9] sm:$0x3] %v674
    $region41: #{tpu_custom_call.1} parent=1 // pred_fallthru
      _
    // Predicated region
    $region42: #{tpu_custom_call.1} parent=1 // pred_check
      _
    $region43: #{tpu_custom_call.1} parent=1 // pred_check_branch
      %677 = sbr.rel (0) target = $region45
    $region44: #{tpu_custom_call.1} parent=1 // pred_region
      %s679 = ssub.s32 32, 32
      %680 = vsyncadd [#allocation5], %s679
      %s682 = sshll.u32 [#allocation9], 4
      %s683 = int_to_ptr.vmem [resolvable:$true] %s682
      %685 = dma.vmem_to_hbm [thread:$0]  %s683, 32, %s5, [#allocation5]
    $region45: #{tpu_custom_call.1} parent=1 // pred_fallthru
      _
    // Predicated region
    $region46: #{tpu_custom_call.1} parent=1 // pred_check
      _
    $region47: #{tpu_custom_call.1} parent=1 // pred_check_branch
      %687 = sbr.rel (0) target = $region49
    $region48: #{tpu_custom_call.1} parent=1 // pred_region
      %688 = dma.done [#allocation5], 32
    $region49: #{tpu_custom_call.1} parent=1 // pred_fallthru
      _
    %689 = vsyncpa [#allocation4], 1
    %690 = vsyncpa [#allocation7], 1
    %691 = vsyncpa [#allocation5], 1

</llo_original>
